<compile_context>
chip_gen: v7x
topology: tpu7x:2x2x1
jax: 0.10.0
libtpu: 0.0.40
codegen_flags: <defaults>
</compile_context>

<pallas_src>
import functools
import math

import jax
import jax.numpy as jnp
from jax.experimental import pallas as pl
from jax.experimental.pallas import tpu as pltpu

BN_EPS = 1e-5
LANE = 128     # vreg lane width
SUBLANE = 8    # vreg sublane count (f32)


def _round_up(v, m):
    return ((v + m - 1) // m) * m


def _vmem_spec():
    return pl.BlockSpec(memory_space=pltpu.MemorySpace.VMEM)


# ----------------------------------------------------------------------------
# Parameter init (torch nn.Linear / nn.BatchNorm1d defaults) + slab packing
# ----------------------------------------------------------------------------
def init_mlp_params(key, n_input, layers):
    """Raw torch-layout parameters (used by the pure-JAX reference)."""
    raw = []
    fan_in = n_input
    for out in layers:
        key, kw, kb = jax.random.split(key, 3)
        bound = 1.0 / math.sqrt(fan_in)
        w = jax.random.uniform(kw, (out, fan_in), jnp.float32, -bound, bound)
        b = jax.random.uniform(kb, (out,), jnp.float32, -bound, bound)
        gamma = jnp.ones((out,), jnp.float32)   # BatchNorm1d weight init
        beta = jnp.zeros((out,), jnp.float32)   # BatchNorm1d bias init
        raw.append(dict(w=w, b=b, gamma=gamma, beta=beta))
        fan_in = out
    return raw


def pack_params(raw, n_input):
    """Pack all layers into one lane-dense (rows, slab_w) f32 slab.

    Per layer, two row-segments (all row offsets are multiples of 8, all column
    extents multiples of 128, so in-kernel static slices are tile-aligned):
      * weight:  (in_pad, slab_w)  = W.T zero-padded
      * aux:     (8, slab_w)       = row0 gamma, row1 beta   (hidden layers)
                                     row0 bias               (last layer)
    Returns (slab, meta, out_dim, in_pad0); meta is a static tuple per layer:
      (w_row, in_pad, out_pad, aux_row).
    """
    n_layers = len(raw)
    dims = [n_input] + [int(p["w"].shape[0]) for p in raw]
    pads = [_round_up(d, LANE) for d in dims]
    slab_w = max(pads)

    segs, meta, row = [], [], 0
    for i, p in enumerate(raw):
        in_dim, out_dim = dims[i], dims[i + 1]
        in_pad, out_pad = pads[i], pads[i + 1]

        wseg = jnp.zeros((in_pad, slab_w), jnp.float32)
        wseg = wseg.at[:in_dim, :out_dim].set(p["w"].T)         # (in, out) for the MXU

        aux = jnp.zeros((SUBLANE, slab_w), jnp.float32)
        if i != n_layers - 1:
            aux = aux.at[0, :out_dim].set(p["gamma"])
            aux = aux.at[1, :out_dim].set(p["beta"])
        else:
            aux = aux.at[0, :out_dim].set(p["b"])

        segs += [wseg, aux]
        meta.append((row, in_pad, out_pad, row + in_pad))
        row += in_pad + SUBLANE

    slab = jnp.concatenate(segs, axis=0)
    return slab, tuple(meta), dims[-1], pads[0]


# ----------------------------------------------------------------------------
# Fused kernel
# ----------------------------------------------------------------------------
def _make_fused_mlp_kernel(meta):
    n_layers = len(meta)

    def kernel(x_ref, p_ref, o_ref):
        h = x_ref[...]                                           # (B, in_pad0), padded
        for i, (w_row, in_pad, out_pad, aux_row) in enumerate(meta):
            w = p_ref[w_row:w_row + in_pad, 0:out_pad]           # static, tile-aligned
            # Pre-BN bias omitted for hidden layers: cancels under batch-mean subtraction.
            z = jnp.dot(h, w, preferred_element_type=jnp.float32)
            if i != n_layers - 1:
                gamma = p_ref[aux_row:aux_row + 1, 0:out_pad]    # (1, out_pad)
                beta = p_ref[aux_row + 1:aux_row + 2, 0:out_pad]
                mean = jnp.mean(z, axis=0, keepdims=True)
                centered = z - mean
                var = jnp.mean(centered * centered, axis=0, keepdims=True)  # biased, 2-pass
                scale = gamma * jax.lax.rsqrt(var + BN_EPS)      # fold gamma: (1,out) op
                h = jnp.maximum(centered * scale + beta, 0.0)    # BN + ReLU
            else:
                b = p_ref[aux_row:aux_row + 1, 0:out_pad]        # (1, out_pad)
                h = jnp.maximum(z + b, 0.0)                      # Linear bias + final ReLU
        o_ref[...] = h

    return kernel


@functools.partial(jax.jit, static_argnames=("meta", "out_dim", "in_pad"))
def _mlp_forward_padded(x, slab, *, meta, out_dim, in_pad):
    B = x.shape[0]
    out_pad_last = meta[-1][2]
    # Lane-dense zero padding of the input features (wrapper-side layout plumbing).
    x_pad = jnp.zeros((B, in_pad), jnp.float32).at[:, : x.shape[1]].set(
        x.astype(jnp.float32)
    )
    out = pl.pallas_call(
        _make_fused_mlp_kernel(meta),
        out_shape=jax.ShapeDtypeStruct((B, out_pad_last), jnp.float32),
        in_specs=[_vmem_spec(), _vmem_spec()],
        out_specs=_vmem_spec(),
    )(x_pad, slab)
    return out[:, :out_dim].astype(jnp.float32)                  # .float() in torch module


def mlp_classifier_forward(x, packed):
    slab, meta, out_dim, in_pad = packed
    return _mlp_forward_padded(x, slab, meta=meta, out_dim=out_dim, in_pad=in_pad)


# ----------------------------------------------------------------------------
# Pure-JAX reference (full torch semantics, incl. the pre-BN bias)
# ----------------------------------------------------------------------------
def reference_forward(x, raw):
    n_layers = len(raw)
    h = x.astype(jnp.float32)
    for i, p in enumerate(raw):
        h = h @ p["w"].T + p["b"]
        if i != n_layers - 1:
            mean = jnp.mean(h, axis=0, keepdims=True)
            var = jnp.mean((h - mean) ** 2, axis=0, keepdims=True)
            h = p["gamma"] * (h - mean) * jax.lax.rsqrt(var + BN_EPS) + p["beta"]
        h = jnp.maximum(h, 0.0)
    return h


if __name__ == "__main__":
    key = jax.random.PRNGKey(0)
    k_x, k_p = jax.random.split(key)

    batch = 8
    n_input = 16
    layers = (32, 32, 8)

    x = jax.random.normal(k_x, (batch, n_input), jnp.float32)
    raw = init_mlp_params(k_p, n_input, layers)
    packed = pack_params(raw, n_input)

    out = mlp_classifier_forward(x, packed)
    out = jax.block_until_ready(out)

    ref = reference_forward(x, raw)
    assert out.shape == (batch, layers[-1]), out.shape
    assert out.dtype == jnp.float32, out.dtype
    assert jnp.allclose(out, ref, atol=1e-4, rtol=1e-4), "mismatch vs pure-JAX reference"

    print("KERNEL_OK")
</pallas_src>

<mosaic_0001>
module attributes {stable_mosaic.version = 11 : i64} {
  func.func @kernel(%arg0: memref<8x128xf32, #tpu.memory_space<vmem>>, %arg1: memref<408x128xf32, #tpu.memory_space<vmem>>, %arg2: memref<8x128xf32, #tpu.memory_space<vmem>>) attributes {dimension_semantics = [], scalar_prefetch = 0 : i64, scratch_operands = 0 : i64, tpu.core_type = #tpu.core_type<tc>} {
    %c0 = arith.constant 0 : index
    %c0_0 = arith.constant 0 : index
    %0 = vector.load %arg0[%c0, %c0_0] : memref<8x128xf32, #tpu.memory_space<vmem>>, vector<8x128xf32>
    %c0_1 = arith.constant 0 : index
    %c0_2 = arith.constant 0 : index
    %1 = vector.load %arg1[%c0_1, %c0_2] : memref<408x128xf32, #tpu.memory_space<vmem>>, vector<128x128xf32>
    %cst = arith.constant dense<0.000000e+00> : vector<8x128xf32>
    %2 = tpu.matmul %0, %1, %cst {dimension_numbers = #tpu.dot_dimension_numbers<[1], [0], [0], [1], [0, 0, 1, 1], [], []>} : vector<8x128xf32>, vector<128x128xf32>, vector<8x128xf32> -> vector<8x128xf32>
    %c128 = arith.constant 128 : index
    %c0_3 = arith.constant 0 : index
    %3 = vector.load %arg1[%c128, %c0_3] : memref<408x128xf32, #tpu.memory_space<vmem>>, vector<1x128xf32>
    %c129 = arith.constant 129 : index
    %c0_4 = arith.constant 0 : index
    %4 = vector.load %arg1[%c129, %c0_4] : memref<408x128xf32, #tpu.memory_space<vmem>>, vector<1x128xf32>
    %cst_5 = arith.constant dense<0.000000e+00> : vector<128xf32>
    %5 = vector.multi_reduction <add>, %2, %cst_5 [0] : vector<8x128xf32> to vector<128xf32>
    %6 = vector.shape_cast %5 : vector<128xf32> to vector<1x128xf32>
    %cst_6 = arith.constant 8.000000e+00 : f32
    %7 = vector.broadcast %cst_6 : f32 to vector<1x128xf32>
    %8 = arith.divf %6, %7 : vector<1x128xf32>
    %9 = vector.broadcast %8 : vector<1x128xf32> to vector<8x128xf32>
    %10 = arith.subf %2, %9 : vector<8x128xf32>
    %11 = arith.mulf %10, %10 : vector<8x128xf32>
    %cst_7 = arith.constant dense<0.000000e+00> : vector<128xf32>
    %12 = vector.multi_reduction <add>, %11, %cst_7 [0] : vector<8x128xf32> to vector<128xf32>
    %13 = vector.shape_cast %12 : vector<128xf32> to vector<1x128xf32>
    %cst_8 = arith.constant 8.000000e+00 : f32
    %14 = vector.broadcast %cst_8 : f32 to vector<1x128xf32>
    %15 = arith.divf %13, %14 : vector<1x128xf32>
    %cst_9 = arith.constant 9.99999974E-6 : f32
    %16 = vector.broadcast %cst_9 : f32 to vector<1x128xf32>
    %17 = arith.addf %15, %16 : vector<1x128xf32>
    %18 = math.rsqrt %17 : vector<1x128xf32>
    %19 = arith.mulf %3, %18 : vector<1x128xf32>
    %20 = vector.broadcast %19 : vector<1x128xf32> to vector<8x128xf32>
    %21 = arith.mulf %10, %20 : vector<8x128xf32>
    %22 = vector.broadcast %4 : vector<1x128xf32> to vector<8x128xf32>
    %23 = arith.addf %21, %22 : vector<8x128xf32>
    %cst_10 = arith.constant 0.000000e+00 : f32
    %24 = vector.broadcast %cst_10 : f32 to vector<8x128xf32>
    %25 = arith.maximumf %23, %24 : vector<8x128xf32>
    %c136 = arith.constant 136 : index
    %c0_11 = arith.constant 0 : index
    %26 = vector.load %arg1[%c136, %c0_11] : memref<408x128xf32, #tpu.memory_space<vmem>>, vector<128x128xf32>
    %cst_12 = arith.constant dense<0.000000e+00> : vector<8x128xf32>
    %27 = tpu.matmul %25, %26, %cst_12 {dimension_numbers = #tpu.dot_dimension_numbers<[1], [0], [0], [1], [0, 0, 1, 1], [], []>} : vector<8x128xf32>, vector<128x128xf32>, vector<8x128xf32> -> vector<8x128xf32>
    %c264 = arith.constant 264 : index
    %c0_13 = arith.constant 0 : index
    %28 = vector.load %arg1[%c264, %c0_13] : memref<408x128xf32, #tpu.memory_space<vmem>>, vector<1x128xf32>
    %c265 = arith.constant 265 : index
    %c0_14 = arith.constant 0 : index
    %29 = vector.load %arg1[%c265, %c0_14] : memref<408x128xf32, #tpu.memory_space<vmem>>, vector<1x128xf32>
    %cst_15 = arith.constant dense<0.000000e+00> : vector<128xf32>
    %30 = vector.multi_reduction <add>, %27, %cst_15 [0] : vector<8x128xf32> to vector<128xf32>
    %31 = vector.shape_cast %30 : vector<128xf32> to vector<1x128xf32>
    %cst_16 = arith.constant 8.000000e+00 : f32
    %32 = vector.broadcast %cst_16 : f32 to vector<1x128xf32>
    %33 = arith.divf %31, %32 : vector<1x128xf32>
    %34 = vector.broadcast %33 : vector<1x128xf32> to vector<8x128xf32>
    %35 = arith.subf %27, %34 : vector<8x128xf32>
    %36 = arith.mulf %35, %35 : vector<8x128xf32>
    %cst_17 = arith.constant dense<0.000000e+00> : vector<128xf32>
    %37 = vector.multi_reduction <add>, %36, %cst_17 [0] : vector<8x128xf32> to vector<128xf32>
    %38 = vector.shape_cast %37 : vector<128xf32> to vector<1x128xf32>
    %cst_18 = arith.constant 8.000000e+00 : f32
    %39 = vector.broadcast %cst_18 : f32 to vector<1x128xf32>
    %40 = arith.divf %38, %39 : vector<1x128xf32>
    %cst_19 = arith.constant 9.99999974E-6 : f32
    %41 = vector.broadcast %cst_19 : f32 to vector<1x128xf32>
    %42 = arith.addf %40, %41 : vector<1x128xf32>
    %43 = math.rsqrt %42 : vector<1x128xf32>
    %44 = arith.mulf %28, %43 : vector<1x128xf32>
    %45 = vector.broadcast %44 : vector<1x128xf32> to vector<8x128xf32>
    %46 = arith.mulf %35, %45 : vector<8x128xf32>
    %47 = vector.broadcast %29 : vector<1x128xf32> to vector<8x128xf32>
    %48 = arith.addf %46, %47 : vector<8x128xf32>
    %cst_20 = arith.constant 0.000000e+00 : f32
    %49 = vector.broadcast %cst_20 : f32 to vector<8x128xf32>
    %50 = arith.maximumf %48, %49 : vector<8x128xf32>
    %c272 = arith.constant 272 : index
    %c0_21 = arith.constant 0 : index
    %51 = vector.load %arg1[%c272, %c0_21] : memref<408x128xf32, #tpu.memory_space<vmem>>, vector<128x128xf32>
    %cst_22 = arith.constant dense<0.000000e+00> : vector<8x128xf32>
    %52 = tpu.matmul %50, %51, %cst_22 {dimension_numbers = #tpu.dot_dimension_numbers<[1], [0], [0], [1], [0, 0, 1, 1], [], []>} : vector<8x128xf32>, vector<128x128xf32>, vector<8x128xf32> -> vector<8x128xf32>
    %c400 = arith.constant 400 : index
    %c0_23 = arith.constant 0 : index
    %53 = vector.load %arg1[%c400, %c0_23] : memref<408x128xf32, #tpu.memory_space<vmem>>, vector<1x128xf32>
    %54 = vector.broadcast %53 : vector<1x128xf32> to vector<8x128xf32>
    %55 = arith.addf %52, %54 : vector<8x128xf32>
    %cst_24 = arith.constant 0.000000e+00 : f32
    %56 = vector.broadcast %cst_24 : f32 to vector<8x128xf32>
    %57 = arith.maximumf %55, %56 : vector<8x128xf32>
    %c0_25 = arith.constant 0 : index
    %c0_26 = arith.constant 0 : index
    %58 = vector.load %arg2[%c0_25, %c0_26] : memref<8x128xf32, #tpu.memory_space<vmem>>, vector<8x128xf32>
    tpu.vector_store %arg2[%c0_25, %c0_26], %57 {strides = array<i32>} : memref<8x128xf32, #tpu.memory_space<vmem>>, vector<8x128xf32>,
    return
  }
}

</mosaic_0001>

<llo_original>
// kernel: _mlp_forward_padded.1
$region0: #{_mlp_forward_padded.1}
  #allocation0 [shape = 'u32[]', space=smem, size = 0x4, offset = 0x4, fixed_abs, tag = 'smem constant byte address 0x4 - core index']
  #allocation1 [shape = 'u32[144,128]{1,0:T(1,128)}', space=vmem, size = 0x12000, scoped, tag = 'internal scratch']
  %s0 = inlined_call_operand.vmem [shape: f32[8,128], index: 0, kind: input, shape index: {}]
  %s1 = inlined_call_operand.hbm [shape: f32[408,128], index: 1, kind: input, shape index: {}]
  %s2 = inlined_call_operand.hbm [shape: f32[8,128], index: 2, kind: output, shape index: {}]
  %s3 = sld [smem:[#allocation0]]
  $region22: #{_mlp_forward_padded.1} parent=0
    _
  %s5 = ssub.s32 1, %s3
  %s6 = scalar_select 0, %s5, %s3
  $region1: #{_mlp_forward_padded.1} parent=0
    #allocation2 [shape = 'u8[208896]{0}', space=vmem, size = 0x33000, scoped, tag = 'input window, operand 1, single buffered']
    #allocation3 [shape = 's32[1]{0}', space=sflag, size = 0x4, scoped, tag = 'scoped memory for _mlp_forward_padded.1']
    #allocation4 [shape = 's32[1]{0}', space=sflag, size = 0x4, scoped, tag = 'scoped memory for _mlp_forward_padded.1']
    #allocation5 [shape = 'u8[4096]{0}', space=vmem, size = 0x1000, scoped, tag = 'output window, operand 0, single buffered']
    %7 = vsyncpa [#allocation3], 0
    %8 = vsyncpa [#allocation4], 0
    // Predicated region
    $region2: #{_mlp_forward_padded.1} parent=1 // pred_check
      _
    $region3: #{_mlp_forward_padded.1} parent=1 // pred_check_branch
      %10 = sbr.rel (0) target = $region5
    $region4: #{_mlp_forward_padded.1} parent=1 // pred_region
      _
    $region5: #{_mlp_forward_padded.1} parent=1 // pred_fallthru
      _
    // Predicated region
    $region6: #{_mlp_forward_padded.1} parent=1 // pred_check
      _
    $region7: #{_mlp_forward_padded.1} parent=1 // pred_check_branch
      %12 = sbr.rel (0) target = $region9
    $region8: #{_mlp_forward_padded.1} parent=1 // pred_region
      %s14 = ssub.s32 6528, 6528
      %15 = vsyncadd [#allocation3], %s14
      %s16 = sshll.u32 [#allocation2], 4
      %s17 = int_to_ptr.vmem [resolvable:$true] %s16
      %22 = dma.hbm_to_vmem [thread:$0]  %s1, 6528, %s17, [#allocation3], 128, 128, 8
    $region9: #{_mlp_forward_padded.1} parent=1 // pred_fallthru
      _
    // Predicated region
    $region10: #{_mlp_forward_padded.1} parent=1 // pred_check
      _
    $region11: #{_mlp_forward_padded.1} parent=1 // pred_check_branch
      %24 = sbr.rel (0) target = $region13
    $region12: #{_mlp_forward_padded.1} parent=1 // pred_region
      %25 = dma.done [#allocation3], 6528
    $region13: #{_mlp_forward_padded.1} parent=1 // pred_fallthru
      _
    %v26 = vld [vmem:[%s0] sm:$0xff]
    %v27 = vld [vmem:[#allocation2] sm:$0xff]
    %v28 = vld [vmem:[#allocation2 + $0x8] sm:$0xff]
    %v29 = vld [vmem:[#allocation2 + $0x10] sm:$0xff]
    %v30 = vld [vmem:[#allocation2 + $0x18] sm:$0xff]
    %v31 = vld [vmem:[#allocation2 + $0x20] sm:$0xff]
    %v32 = vld [vmem:[#allocation2 + $0x28] sm:$0xff]
    %v33 = vld [vmem:[#allocation2 + $0x30] sm:$0xff]
    %v34 = vld [vmem:[#allocation2 + $0x38] sm:$0xff]
    %v35 = vld [vmem:[#allocation2 + $0x40] sm:$0xff]
    %v36 = vld [vmem:[#allocation2 + $0x48] sm:$0xff]
    %v37 = vld [vmem:[#allocation2 + $0x50] sm:$0xff]
    %v38 = vld [vmem:[#allocation2 + $0x58] sm:$0xff]
    %v39 = vld [vmem:[#allocation2 + $0x60] sm:$0xff]
    %v40 = vld [vmem:[#allocation2 + $0x68] sm:$0xff]
    %v41 = vld [vmem:[#allocation2 + $0x70] sm:$0xff]
    %v42 = vld [vmem:[#allocation2 + $0x78] sm:$0xff]
    %43 = vmatprep.subr.mxu0 0.0
    %44 = vmatpush1.msra.mxu0 %v27
    %45 = vmatprep.subr.mxu0 0.0
    %46 = vmatpush1.msra.mxu0 %v28
    %47 = vmatprep.subr.mxu0 0.0
    %48 = vmatpush1.msra.mxu0 %v29
    %49 = vmatprep.subr.mxu0 0.0
    %50 = vmatpush1.msra.mxu0 %v30
    %51 = vmatprep.subr.mxu0 0.0
    %52 = vmatpush1.msra.mxu0 %v31
    %53 = vmatprep.subr.mxu0 0.0
    %54 = vmatpush1.msra.mxu0 %v32
    %55 = vmatprep.subr.mxu0 0.0
    %56 = vmatpush1.msra.mxu0 %v33
    %57 = vmatprep.subr.mxu0 0.0
    %58 = vmatpush1.msra.mxu0 %v34
    %59 = vmatprep.subr.mxu0 0.0
    %60 = vmatpush1.msra.mxu0 %v35
    %61 = vmatprep.subr.mxu0 0.0
    %62 = vmatpush1.msra.mxu0 %v36
    %63 = vmatprep.subr.mxu0 0.0
    %64 = vmatpush1.msra.mxu0 %v37
    %65 = vmatprep.subr.mxu0 0.0
    %66 = vmatpush1.msra.mxu0 %v38
    %67 = vmatprep.subr.mxu0 0.0
    %68 = vmatpush1.msra.mxu0 %v39
    %69 = vmatprep.subr.mxu0 0.0
    %70 = vmatpush1.msra.mxu0 %v40
    %71 = vmatprep.subr.mxu0 0.0
    %72 = vmatpush1.msra.mxu0 %v41
    %73 = vmatprep.subr.mxu0 0.0
    %74 = vmatpush1.msra.mxu0 %v42
    %75 = vmatprep.subr.mxu0 0.0
    %76 = vmatpush1.msra.mxu0 0.0
    %77 = vmatprep.subr.mxu0 0.0
    %78 = vmatpush1.msra.mxu0 0.0
    %79 = vmatprep.subr.mxu0 0.0
    %80 = vmatpush1.msra.mxu0 0.0
    %81 = vmatprep.subr.mxu0 0.0
    %82 = vmatpush1.msra.mxu0 0.0
    %83 = vmatprep.subr.mxu0 0.0
    %84 = vmatpush1.msra.mxu0 0.0
    %85 = vmatprep.subr.mxu0 0.0
    %86 = vmatpush1.msra.mxu0 0.0
    %87 = vmatprep.subr.mxu0 0.0
    %88 = vmatpush1.msra.mxu0 0.0
    %89 = vmatprep.subr.mxu0 0.0
    %90 = vmatpush1.msra.mxu0 0.0
    %91 = vmatprep.subr.mxu0 0.0
    %92 = vmatpush1.msra.mxu0 0.0
    %93 = vmatprep.subr.mxu0 0.0
    %94 = vmatpush1.msra.mxu0 0.0
    %95 = vmatprep.subr.mxu0 0.0
    %96 = vmatpush1.msra.mxu0 0.0
    %97 = vmatprep.subr.mxu0 0.0
    %98 = vmatpush1.msra.mxu0 0.0
    %99 = vmatprep.subr.mxu0 0.0
    %100 = vmatpush1.msra.mxu0 0.0
    %101 = vmatprep.subr.mxu0 0.0
    %102 = vmatpush1.msra.mxu0 0.0
    %103 = vmatprep.subr.mxu0 0.0
    %104 = vmatpush1.msra.mxu0 0.0
    %105 = vmatprep.subr.mxu0 0.0
    %106 = vmatpush1.msra.mxu0 0.0
    %107 = vmatprep.mubr.f32.mxu0 0.0
    %108 = vmatmul.mubr.f32.gmra.mrb[0].mxu0 %v26
    %v109 = vpop.f32.mrb[0].mxu0
    %v110 = vadd.f32 0.0, %v109
    %v111 = vpop.f32.mrb[0].mxu0
    %112 = vdwg.mxu0
    %v113 = vld [vmem:[#allocation2 + $0x80] sm:$0x1]
    %v114 = vld [vmem:[#allocation2 + $0x81] sm:$0x1]
    %v115 = vrot.slane %v110, 4
    %v116 = vadd.f32 %v110, %v115
    %v117 = vrot.slane %v116, 2
    %v118 = vadd.f32 %v116, %v117
    %v119 = vrot.slane %v118, 1
    %v120 = vadd.f32 %v118, %v119
    %v121 = vrcp.pop 8.0
    %v122 = vmul.f32 %v120, %v121
    %v123 = vsub.f32 %v110, %v122
    %v124 = vmul.f32 %v123, %v123
    %v125 = vrot.slane %v124, 4
    %v126 = vadd.f32 %v124, %v125
    %v127 = vrot.slane %v126, 2
    %v128 = vadd.f32 %v126, %v127
    %v129 = vrot.slane %v128, 1
    %v130 = vadd.f32 %v128, %v129
    %v131 = vmul.f32 %v130, %v121
    %v132 = vadd.f32 %v131, 1e-05
    %v133 = vrsqrt.pop %v132
    %v134 = vmul.f32 %v113, %v133
    %v135 = vlaneseq
    %v136 = vshrl.u32 %v135, 7
    %v137 = vsub.s32 0, %v136
    %v138 = vrot.slane %v134, %v137
    %v139 = vmul.f32 %v123, %v138
    %v140 = vlaneseq
    %v141 = vshrl.u32 %v140, 7
    %v142 = vsub.s32 0, %v141
    %v143 = vrot.slane %v114, %v142
    %v144 = vadd.f32 %v139, %v143
    %v145 = vmax.f32 %v144, 0.0
    %v146 = vld [vmem:[#allocation2 + $0x88] sm:$0xff]
    %v147 = vld [vmem:[#allocation2 + $0x90] sm:$0xff]
    %v148 = vld [vmem:[#allocation2 + $0x98] sm:$0xff]
    %v149 = vld [vmem:[#allocation2 + $0xa0] sm:$0xff]
    %v150 = vld [vmem:[#allocation2 + $0xa8] sm:$0xff]
    %v151 = vld [vmem:[#allocation2 + $0xb0] sm:$0xff]
    %v152 = vld [vmem:[#allocation2 + $0xb8] sm:$0xff]
    %v153 = vld [vmem:[#allocation2 + $0xc0] sm:$0xff]
    %v154 = vld [vmem:[#allocation2 + $0xc8] sm:$0xff]
    %v155 = vld [vmem:[#allocation2 + $0xd0] sm:$0xff]
    %v156 = vld [vmem:[#allocation2 + $0xd8] sm:$0xff]
    %v157 = vld [vmem:[#allocation2 + $0xe0] sm:$0xff]
    %v158 = vld [vmem:[#allocation2 + $0xe8] sm:$0xff]
    %v159 = vld [vmem:[#allocation2 + $0xf0] sm:$0xff]
    %v160 = vld [vmem:[#allocation2 + $0xf8] sm:$0xff]
    %v161 = vld [vmem:[#allocation2 + $0x100] sm:$0xff]
    %162 = vmatprep.subr.mxu0 0.0
    %163 = vmatpush1.msra.mxu0 %v146
    %164 = vmatprep.subr.mxu0 0.0
    %165 = vmatpush1.msra.mxu0 %v147
    %166 = vmatprep.subr.mxu0 0.0
    %167 = vmatpush1.msra.mxu0 %v148
    %168 = vmatprep.subr.mxu0 0.0
    %169 = vmatpush1.msra.mxu0 %v149
    %170 = vmatprep.subr.mxu0 0.0
    %171 = vmatpush1.msra.mxu0 %v150
    %172 = vmatprep.subr.mxu0 0.0
    %173 = vmatpush1.msra.mxu0 %v151
    %174 = vmatprep.subr.mxu0 0.0
    %175 = vmatpush1.msra.mxu0 %v152
    %176 = vmatprep.subr.mxu0 0.0
    %177 = vmatpush1.msra.mxu0 %v153
    %178 = vmatprep.subr.mxu0 0.0
    %179 = vmatpush1.msra.mxu0 %v154
    %180 = vmatprep.subr.mxu0 0.0
    %181 = vmatpush1.msra.mxu0 %v155
    %182 = vmatprep.subr.mxu0 0.0
    %183 = vmatpush1.msra.mxu0 %v156
    %184 = vmatprep.subr.mxu0 0.0
    %185 = vmatpush1.msra.mxu0 %v157
    %186 = vmatprep.subr.mxu0 0.0
    %187 = vmatpush1.msra.mxu0 %v158
    %188 = vmatprep.subr.mxu0 0.0
    %189 = vmatpush1.msra.mxu0 %v159
    %190 = vmatprep.subr.mxu0 0.0
    %191 = vmatpush1.msra.mxu0 %v160
    %192 = vmatprep.subr.mxu0 0.0
    %193 = vmatpush1.msra.mxu0 %v161
    %194 = vmatprep.subr.mxu0 0.0
    %195 = vmatpush1.msra.mxu0 0.0
    %196 = vmatprep.subr.mxu0 0.0
    %197 = vmatpush1.msra.mxu0 0.0
    %198 = vmatprep.subr.mxu0 0.0
    %199 = vmatpush1.msra.mxu0 0.0
    %200 = vmatprep.subr.mxu0 0.0
    %201 = vmatpush1.msra.mxu0 0.0
    %202 = vmatprep.subr.mxu0 0.0
    %203 = vmatpush1.msra.mxu0 0.0
    %204 = vmatprep.subr.mxu0 0.0
    %205 = vmatpush1.msra.mxu0 0.0
    %206 = vmatprep.subr.mxu0 0.0
    %207 = vmatpush1.msra.mxu0 0.0
    %208 = vmatprep.subr.mxu0 0.0
    %209 = vmatpush1.msra.mxu0 0.0
    %210 = vmatprep.subr.mxu0 0.0
    %211 = vmatpush1.msra.mxu0 0.0
    %212 = vmatprep.subr.mxu0 0.0
    %213 = vmatpush1.msra.mxu0 0.0
    %214 = vmatprep.subr.mxu0 0.0
    %215 = vmatpush1.msra.mxu0 0.0
    %216 = vmatprep.subr.mxu0 0.0
    %217 = vmatpush1.msra.mxu0 0.0
    %218 = vmatprep.subr.mxu0 0.0
    %219 = vmatpush1.msra.mxu0 0.0
    %220 = vmatprep.subr.mxu0 0.0
    %221 = vmatpush1.msra.mxu0 0.0
    %222 = vmatprep.subr.mxu0 0.0
    %223 = vmatpush1.msra.mxu0 0.0
    %224 = vmatprep.subr.mxu0 0.0
    %225 = vmatpush1.msra.mxu0 0.0
    %226 = vmatprep.mubr.f32.mxu0 0.0
    %227 = vmatmul.mubr.f32.gmra.mrb[0].mxu0 %v145
    %v228 = vpop.f32.mrb[0].mxu0
    %v229 = vadd.f32 0.0, %v228
    %v230 = vpop.f32.mrb[0].mxu0
    %231 = vdwg.mxu0
    %v232 = vld [vmem:[#allocation2 + $0x108] sm:$0x1]
    %v233 = vld [vmem:[#allocation2 + $0x109] sm:$0x1]
    %v234 = vrot.slane %v229, 4
    %v235 = vadd.f32 %v229, %v234
    %v236 = vrot.slane %v235, 2
    %v237 = vadd.f32 %v235, %v236
    %v238 = vrot.slane %v237, 1
    %v239 = vadd.f32 %v237, %v238
    %v240 = vmul.f32 %v239, %v121
    %v241 = vsub.f32 %v229, %v240
    %v242 = vmul.f32 %v241, %v241
    %v243 = vrot.slane %v242, 4
    %v244 = vadd.f32 %v242, %v243
    %v245 = vrot.slane %v244, 2
    %v246 = vadd.f32 %v244, %v245
    %v247 = vrot.slane %v246, 1
    %v248 = vadd.f32 %v246, %v247
    %v249 = vmul.f32 %v248, %v121
    %v250 = vadd.f32 %v249, 1e-05
    %v251 = vrsqrt.pop %v250
    %v252 = vmul.f32 %v232, %v251
    %v253 = vlaneseq
    %v254 = vshrl.u32 %v253, 7
    %v255 = vsub.s32 0, %v254
    %v256 = vrot.slane %v252, %v255
    %v257 = vmul.f32 %v241, %v256
    %v258 = vlaneseq
    %v259 = vshrl.u32 %v258, 7
    %v260 = vsub.s32 0, %v259
    %v261 = vrot.slane %v233, %v260
    %v262 = vadd.f32 %v257, %v261
    %v263 = vmax.f32 %v262, 0.0
    %v264 = vld [vmem:[#allocation2 + $0x110] sm:$0xff]
    %v265 = vld [vmem:[#allocation2 + $0x118] sm:$0xff]
    %v266 = vld [vmem:[#allocation2 + $0x120] sm:$0xff]
    %v267 = vld [vmem:[#allocation2 + $0x128] sm:$0xff]
    %v268 = vld [vmem:[#allocation2 + $0x130] sm:$0xff]
    %v269 = vld [vmem:[#allocation2 + $0x138] sm:$0xff]
    %v270 = vld [vmem:[#allocation2 + $0x140] sm:$0xff]
    %v271 = vld [vmem:[#allocation2 + $0x148] sm:$0xff]
    %v272 = vld [vmem:[#allocation2 + $0x150] sm:$0xff]
    %v273 = vld [vmem:[#allocation2 + $0x158] sm:$0xff]
    %v274 = vld [vmem:[#allocation2 + $0x160] sm:$0xff]
    %v275 = vld [vmem:[#allocation2 + $0x168] sm:$0xff]
    %v276 = vld [vmem:[#allocation2 + $0x170] sm:$0xff]
    %v277 = vld [vmem:[#allocation2 + $0x178] sm:$0xff]
    %v278 = vld [vmem:[#allocation2 + $0x180] sm:$0xff]
    %v279 = vld [vmem:[#allocation2 + $0x188] sm:$0xff]
    %v280 = vld [vmem:[#allocation2 + $0x190] sm:$0x1]
    %v281 = vlaneseq
    %v282 = vshrl.u32 %v281, 7
    %v283 = vsub.s32 0, %v282
    %v284 = vrot.slane %v280, %v283
    %285 = vmatprep.subr.mxu0 0.0
    %286 = vmatpush1.msra.mxu0 %v264
    %287 = vmatprep.subr.mxu0 0.0
    %288 = vmatpush1.msra.mxu0 %v265
    %289 = vmatprep.subr.mxu0 0.0
    %290 = vmatpush1.msra.mxu0 %v266
    %291 = vmatprep.subr.mxu0 0.0
    %292 = vmatpush1.msra.mxu0 %v267
    %293 = vmatprep.subr.mxu0 0.0
    %294 = vmatpush1.msra.mxu0 %v268
    %295 = vmatprep.subr.mxu0 0.0
    %296 = vmatpush1.msra.mxu0 %v269
    %297 = vmatprep.subr.mxu0 0.0
    %298 = vmatpush1.msra.mxu0 %v270
    %299 = vmatprep.subr.mxu0 0.0
    %300 = vmatpush1.msra.mxu0 %v271
    %301 = vmatprep.subr.mxu0 0.0
    %302 = vmatpush1.msra.mxu0 %v272
    %303 = vmatprep.subr.mxu0 0.0
    %304 = vmatpush1.msra.mxu0 %v273
    %305 = vmatprep.subr.mxu0 0.0
    %306 = vmatpush1.msra.mxu0 %v274
    %307 = vmatprep.subr.mxu0 0.0
    %308 = vmatpush1.msra.mxu0 %v275
    %309 = vmatprep.subr.mxu0 0.0
    %310 = vmatpush1.msra.mxu0 %v276
    %311 = vmatprep.subr.mxu0 0.0
    %312 = vmatpush1.msra.mxu0 %v277
    %313 = vmatprep.subr.mxu0 0.0
    %314 = vmatpush1.msra.mxu0 %v278
    %315 = vmatprep.subr.mxu0 0.0
    %316 = vmatpush1.msra.mxu0 %v279
    %317 = vmatprep.subr.mxu0 0.0
    %318 = vmatpush1.msra.mxu0 0.0
    %319 = vmatprep.subr.mxu0 0.0
    %320 = vmatpush1.msra.mxu0 0.0
    %321 = vmatprep.subr.mxu0 0.0
    %322 = vmatpush1.msra.mxu0 0.0
    %323 = vmatprep.subr.mxu0 0.0
    %324 = vmatpush1.msra.mxu0 0.0
    %325 = vmatprep.subr.mxu0 0.0
    %326 = vmatpush1.msra.mxu0 0.0
    %327 = vmatprep.subr.mxu0 0.0
    %328 = vmatpush1.msra.mxu0 0.0
    %329 = vmatprep.subr.mxu0 0.0
    %330 = vmatpush1.msra.mxu0 0.0
    %331 = vmatprep.subr.mxu0 0.0
    %332 = vmatpush1.msra.mxu0 0.0
    %333 = vmatprep.subr.mxu0 0.0
    %334 = vmatpush1.msra.mxu0 0.0
    %335 = vmatprep.subr.mxu0 0.0
    %336 = vmatpush1.msra.mxu0 0.0
    %337 = vmatprep.subr.mxu0 0.0
    %338 = vmatpush1.msra.mxu0 0.0
    %339 = vmatprep.subr.mxu0 0.0
    %340 = vmatpush1.msra.mxu0 0.0
    %341 = vmatprep.subr.mxu0 0.0
    %342 = vmatpush1.msra.mxu0 0.0
    %343 = vmatprep.subr.mxu0 0.0
    %344 = vmatpush1.msra.mxu0 0.0
    %345 = vmatprep.subr.mxu0 0.0
    %346 = vmatpush1.msra.mxu0 0.0
    %347 = vmatprep.subr.mxu0 0.0
    %348 = vmatpush1.msra.mxu0 0.0
    %349 = vmatprep.mubr.f32.mxu0 0.0
    %350 = vmatmul.mubr.f32.gmra.mrb[0].mxu0 %v263
    %v351 = vpop.f32.mrb[0].mxu0
    %v352 = vadd.f32 %v284, %v351
    %v353 = vpop.f32.mrb[0].mxu0
    %354 = vdwg.mxu0
    %v355 = vmax.f32 %v352, 0.0
    %356 = vst [vmem:[#allocation5] sm:$0xff] %v355
    // Predicated region
    $region14: #{_mlp_forward_padded.1} parent=1 // pred_check
      _
    $region15: #{_mlp_forward_padded.1} parent=1 // pred_check_branch
      %358 = sbr.rel (0) target = $region17
    $region16: #{_mlp_forward_padded.1} parent=1 // pred_region
      %s360 = ssub.s32 128, 128
      %361 = vsyncadd [#allocation4], %s360
      %s363 = sshll.u32 [#allocation5], 4
      %s364 = int_to_ptr.vmem [resolvable:$true] %s363
      %366 = dma.vmem_to_hbm [thread:$0]  %s364, 128, %s2, [#allocation4]
    $region17: #{_mlp_forward_padded.1} parent=1 // pred_fallthru
      _
    // Predicated region
    $region18: #{_mlp_forward_padded.1} parent=1 // pred_check
      _
    $region19: #{_mlp_forward_padded.1} parent=1 // pred_check_branch
      %368 = sbr.rel (0) target = $region21
    $region20: #{_mlp_forward_padded.1} parent=1 // pred_region
      %369 = dma.done [#allocation4], 128
    $region21: #{_mlp_forward_padded.1} parent=1 // pred_fallthru
      _
    %370 = vsyncpa [#allocation3], 1
    %371 = vsyncpa [#allocation4], 1

</llo_original>
